<compile_context>
chip_gen: v5e
topology: v5e:2x2
jax: 0.10.0
libtpu: 0.0.40
codegen_flags: <defaults>
</compile_context>

<pallas_src>
import functools

import jax
import jax.numpy as jnp
from jax import lax
from jax.experimental import pallas as pl
from jax.experimental.pallas import tpu as pltpu

# ---- module hyperparameters (from the PyTorch source) ----
N_EMBED = 384          # C
HEAD_SIZE = 16
BLOCK_SIZE = 256       # max sequence length of the tril buffer (T <= BLOCK_SIZE)

_NEG_INF = -1e30       # exp() underflows to exactly 0 in f32; avoids inf-inf NaN


def _head_kernel(x_ref, w_ref, o_ref, *, head_size, tq):
    """One grid step == Bb batch elements.

    x_ref : (Bb, T, C)  f32   streamed input (cast to bf16 in-kernel, hidden under MXU)
    w_ref : (C, 3H)     bf16  fused [Wq * C**-0.5 | Wk | Wv], resident across the grid
    o_ref : (Bb, H, T)  f32   attention output, stored transposed (lane dim = T, lane-dense)
    """
    Bb, T, C = x_ref.shape
    H = head_size

    x = x_ref[...].astype(jnp.bfloat16)       # VPU cast; no separate HBM pass for bf16 x
    w = w_ref[...]                            # (C, 3H) bf16

    # Fused QKV projection: single MXU pass with N = 3H instead of three N = H passes.
    qkv = jnp.dot(x.reshape(Bb * T, C), w,
                  preferred_element_type=jnp.float32)              # (Bb*T, 3H) f32
    qkv = qkv.reshape(Bb, T, 3 * H)

    q = qkv[:, :, 0:H].astype(jnp.bfloat16)                        # scale already folded into Wq
    k = qkv[:, :, H:2 * H].astype(jnp.bfloat16)                    # (Bb, T, H)
    v = qkv[:, :, 2 * H:3 * H].astype(jnp.bfloat16)                # (Bb, T, H)

    # v transposed once so the p@v output lane dim is tq, with an appended ones-row so the
    # same matmul also produces the softmax row-sums (denominator) "for free" on the MXU.
    v_t = jnp.swapaxes(v, 1, 2)                                    # (Bb, H, T)
    v_aug = jnp.concatenate(
        [v_t, jnp.ones((Bb, 1, T), dtype=jnp.bfloat16)], axis=1)   # (Bb, H+1, T)

    # (col - row) iota precomputed once; per-tile causal mask is a single compare.
    col_minus_row = (lax.broadcasted_iota(jnp.int32, (tq, T), 1)
                     - lax.broadcasted_iota(jnp.int32, (tq, T), 0))  # (tq, T)

    # Attention blocked over query rows; nq is static (<= 2 for T <= 256 with tq = 128).
    nq = T // tq
    for qi in range(nq):
        lo = qi * tq
        kend = lo + tq            # causal horizon: key tiles beyond kend are skipped entirely

        q_blk = q[:, lo:kend, :]                                   # (Bb, tq, H)
        k_blk = k[:, :kend, :]                                     # (Bb, kend, H)
        v_blk = v_aug[:, :, :kend]                                 # (Bb, H+1, kend)

        # scores over visible keys only (no MXU/EUP/VPU work on fully-masked key tiles)
        s = lax.dot_general(
            q_blk, k_blk,
            dimension_numbers=(((2,), (2,)), ((0,), (0,))),
            preferred_element_type=jnp.float32)                    # (Bb, tq, kend) f32

        mask = col_minus_row[:, :kend] <= lo                       # key_idx <= query_idx
        s = jnp.where(mask[None], s, _NEG_INF)

        # row-stable softmax in f32; normalization deferred to the (small) transposed output
        m = jnp.max(s, axis=-1, keepdims=True)                     # (Bb, tq, 1)
        p = jnp.exp(s - m).astype(jnp.bfloat16)                    # (Bb, tq, kend)

        # dropout == identity (eval semantics)

        # transposed p@v (+ row-sum row): output lane dim = tq, not H
        acc_aug = lax.dot_general(
            v_blk, p,
            dimension_numbers=(((2,), (2,)), ((0,), (0,))),
            preferred_element_type=jnp.float32)                    # (Bb, H+1, tq) f32

        inv_l = pl.reciprocal(acc_aug[:, H:H + 1, :], approx=True)  # (Bb, 1, tq) EUP
        o_ref[:, :, lo:kend] = (acc_aug[:, :H, :] * inv_l).astype(o_ref.dtype)


def _pick_batch_block(B, max_bb=16):
    """Largest divisor of B up to max_bb, preferring an EVEN number of grid steps.

    Even step counts keep both v7x TensorCores busy on the 'parallel' axis; large blocks
    amortize per-step overhead on single-TC v5e/v6e. VMEM is not binding at max_bb=16."""
    divisors = [d for d in range(1, min(max_bb, B) + 1) if B % d == 0]
    even_steps = [d for d in divisors if (B // d) % 2 == 0]
    return max(even_steps) if even_steps else max(divisors)


def head_forward(x, wk, wq, wv):
    """x: (B, T, C) float32; wk/wq/wv: (C, head_size), stored as weight.T.
    Returns (B, T, head_size) float32."""
    B, T, C = x.shape
    H = wk.shape[1]
    assert T <= BLOCK_SIZE and C == wk.shape[0]

    # Fuse the three projection weights into one (C, 3H) bf16 matrix, folding the
    # C**-0.5 score scale (PyTorch scales by n_embed, not head_size) into the q columns.
    scale = float(C) ** -0.5
    w_qkv = jnp.concatenate([wq * scale, wk, wv], axis=1).astype(jnp.bfloat16)   # (C, 3H)

    Bb = _pick_batch_block(B)
    tq = 128 if (T > 128 and T % 128 == 0) else T   # query-row tile inside the kernel

    kernel = functools.partial(_head_kernel, head_size=H, tq=tq)

    out_t = pl.pallas_call(
        kernel,
        out_shape=jax.ShapeDtypeStruct((B, H, T), jnp.float32),
        grid_spec=pltpu.PrefetchScalarGridSpec(
            num_scalar_prefetch=0,
            grid=(B // Bb,),
            in_specs=[
                pl.BlockSpec((Bb, T, C), lambda b: (b, 0, 0)),     # x (f32), Bb seqs per step
                pl.BlockSpec((C, 3 * H), lambda b: (0, 0)),        # fused Wqkv (resident)
            ],
            out_specs=pl.BlockSpec((Bb, H, T), lambda b: (b, 0, 0)),
        ),
        compiler_params=pltpu.CompilerParams(
            dimension_semantics=("parallel",),
            vmem_limit_bytes=48 * 1024 * 1024),
    )(x, w_qkv)

    # Tiny tensor: transpose (B, H, T) -> (B, T, H) outside the kernel.
    return jnp.swapaxes(out_t, 1, 2)


def reference_forward(x, wk, wq, wv):
    """Pure-JAX f32 reference for correctness checking."""
    B, T, C = x.shape
    k = x @ wk
    q = x @ wq
    v = x @ wv
    wei = (q @ jnp.swapaxes(k, -2, -1)) * (C ** -0.5)
    tril = jnp.tril(jnp.ones((T, T), dtype=bool))
    wei = jnp.where(tril, wei, -jnp.inf)
    wei = jax.nn.softmax(wei, axis=-1)
    return wei @ v


if __name__ == "__main__":
    key = jax.random.PRNGKey(0)
    kx, kk, kq, kv = jax.random.split(key, 4)

    C, H = N_EMBED, HEAD_SIZE
    bound = 1.0 / (C ** 0.5)
    # deterministic "Linear(bias=False)" weights, stored as (C, H) == weight.T
    wk = jax.random.uniform(kk, (C, H), jnp.float32, -bound, bound)
    wq = jax.random.uniform(kq, (C, H), jnp.float32, -bound, bound)
    wv = jax.random.uniform(kv, (C, H), jnp.float32, -bound, bound)

    # small, deterministic example: batch=2, seq=8, embed=n_embed=384, head_size=16
    B, T = 2, 8
    x = jax.random.normal(kx, (B, T, C), dtype=jnp.float32)
    out = jax.block_until_ready(head_forward(x, wk, wq, wv))
    ref = reference_forward(x, wk, wq, wv)
    assert out.shape == (B, T, H)
    err = float(jnp.max(jnp.abs(out - ref)))
    assert jnp.allclose(out, ref, atol=2e-2, rtol=2e-2), f"mismatch (T=8), max abs err {err}"

    # also exercise the module's native block_size (multi-q-tile causal key-skipping path)
    B2, T2 = 2, BLOCK_SIZE
    x2 = jax.random.normal(kx, (B2, T2, C), dtype=jnp.float32)
    out2 = jax.block_until_ready(head_forward(x2, wk, wq, wv))
    ref2 = reference_forward(x2, wk, wq, wv)
    assert out2.shape == (B2, T2, H)
    err2 = float(jnp.max(jnp.abs(out2 - ref2)))
    assert jnp.allclose(out2, ref2, atol=2e-2, rtol=2e-2), f"mismatch (T=256), max abs err {err2}"

    print("KERNEL_OK")
</pallas_src>

<mosaic_0001>
module attributes {stable_mosaic.version = 11 : i64} {
  func.func @_head_kernel(%arg0: i32, %arg1: memref<1x8x384xf32, #tpu.memory_space<vmem>>, %arg2: memref<384x48xbf16, #tpu.memory_space<vmem>>, %arg3: memref<1x16x8xf32, #tpu.memory_space<vmem>>) attributes {dimension_semantics = [#tpu.dimension_semantics<parallel>], iteration_bounds = array<i64: 2>, scalar_prefetch = 0 : i64, scratch_operands = 0 : i64, tpu.core_type = #tpu.core_type<tc>, window_params = [{transform_indices = @transform_0, window_bounds = array<i64: 1, 8, 384>}, {pipeline_mode = #tpu.pipeline_mode<synchronous>, transform_indices = @transform_1, window_bounds = array<i64: 384, 48>}, {transform_indices = @transform_2, window_bounds = array<i64: 1, 16, 8>}]} {
    %c0 = arith.constant 0 : index
    %c0_0 = arith.constant 0 : index
    %c0_1 = arith.constant 0 : index
    %0 = vector.load %arg1[%c0, %c0_0, %c0_1] : memref<1x8x384xf32, #tpu.memory_space<vmem>>, vector<1x8x384xf32>
    %1 = arith.truncf %0 : vector<1x8x384xf32> to vector<1x8x384xbf16>
    %c0_2 = arith.constant 0 : index
    %c0_3 = arith.constant 0 : index
    %2 = vector.load %arg2[%c0_2, %c0_3] : memref<384x48xbf16, #tpu.memory_space<vmem>>, vector<384x48xbf16>
    %3 = vector.shape_cast %1 : vector<1x8x384xbf16> to vector<8x384xbf16>
    %cst = arith.constant dense<0.000000e+00> : vector<8x48xf32>
    %4 = tpu.matmul %3, %2, %cst {dimension_numbers = #tpu.dot_dimension_numbers<[1], [0], [0], [1], [0, 0, 1, 1], [], []>} : vector<8x384xbf16>, vector<384x48xbf16>, vector<8x48xf32> -> vector<8x48xf32>
    %5 = vector.shape_cast %4 : vector<8x48xf32> to vector<1x8x48xf32>
    %6 = vector.extract_strided_slice %5 {offsets = [0, 0, 0], sizes = [1, 8, 16], strides = [1, 1, 1]} : vector<1x8x48xf32> to vector<1x8x16xf32>
    %7 = arith.truncf %6 : vector<1x8x16xf32> to vector<1x8x16xbf16>
    %8 = vector.extract_strided_slice %5 {offsets = [0, 0, 16], sizes = [1, 8, 16], strides = [1, 1, 1]} : vector<1x8x48xf32> to vector<1x8x16xf32>
    %9 = arith.truncf %8 : vector<1x8x16xf32> to vector<1x8x16xbf16>
    %10 = vector.extract_strided_slice %5 {offsets = [0, 0, 32], sizes = [1, 8, 16], strides = [1, 1, 1]} : vector<1x8x48xf32> to vector<1x8x16xf32>
    %11 = arith.truncf %10 : vector<1x8x16xf32> to vector<1x8x16xbf16>
    %12 = tpu.transpose %11, [0, 2, 1] : vector<1x8x16xbf16> -> vector<1x16x8xbf16>
    %cst_4 = arith.constant 1.000000e+00 : bf16
    %13 = vector.broadcast %cst_4 : bf16 to vector<1x1x8xbf16>
    %14 = tpu.concatenate %12, %13 in 1 : vector<1x16x8xbf16>, vector<1x1x8xbf16> -> vector<1x17x8xbf16>
    %15 = tpu.iota {dimensions = array<i32: 1>} : vector<8x8xi32>
    %16 = tpu.iota {dimensions = array<i32: 0>} : vector<8x8xi32>
    %17 = arith.subi %15, %16 : vector<8x8xi32>
    %cst_5 = arith.constant dense<0.000000e+00> : vector<1x8x8xf32>
    %18 = tpu.matmul %7, %9, %cst_5 {dimension_numbers = #tpu.dot_dimension_numbers<[2], [2], [1], [1], [0, 0, 0, 1, 1, 1], [0], [0]>} : vector<1x8x16xbf16>, vector<1x8x16xbf16>, vector<1x8x8xf32> -> vector<1x8x8xf32>
    %c0_i32 = arith.constant 0 : i32
    %19 = vector.broadcast %c0_i32 : i32 to vector<8x8xi32>
    %20 = arith.cmpi sle, %17, %19 : vector<8x8xi32>
    %21 = vector.shape_cast %20 : vector<8x8xi1> to vector<1x8x8xi1>
    %cst_6 = arith.constant -1.000000e+30 : f32
    %22 = vector.broadcast %cst_6 : f32 to vector<1x8x8xf32>
    %23 = arith.select %21, %18, %22 : vector<1x8x8xi1>, vector<1x8x8xf32>
    %cst_7 = arith.constant dense<0xFF800000> : vector<1x8xf32>
    %24 = vector.multi_reduction <maximumf>, %23, %cst_7 [2] : vector<1x8x8xf32> to vector<1x8xf32>
    %25 = vector.shape_cast %24 : vector<1x8xf32> to vector<1x8x1xf32>
    %26 = vector.broadcast %25 : vector<1x8x1xf32> to vector<1x8x8xf32>
    %27 = arith.subf %23, %26 : vector<1x8x8xf32>
    %28 = math.exp %27 : vector<1x8x8xf32>
    %29 = arith.truncf %28 : vector<1x8x8xf32> to vector<1x8x8xbf16>
    %cst_8 = arith.constant dense<0.000000e+00> : vector<1x17x8xf32>
    %30 = tpu.matmul %14, %29, %cst_8 {dimension_numbers = #tpu.dot_dimension_numbers<[2], [2], [1], [1], [0, 0, 0, 1, 1, 1], [0], [0]>} : vector<1x17x8xbf16>, vector<1x8x8xbf16>, vector<1x17x8xf32> -> vector<1x17x8xf32>
    %31 = vector.extract_strided_slice %30 {offsets = [0, 16, 0], sizes = [1, 1, 8], strides = [1, 1, 1]} : vector<1x17x8xf32> to vector<1x1x8xf32>
    %32 = tpu.reciprocal %31 {approx = true} : vector<1x1x8xf32> -> vector<1x1x8xf32>
    %33 = vector.extract_strided_slice %30 {offsets = [0, 0, 0], sizes = [1, 16, 8], strides = [1, 1, 1]} : vector<1x17x8xf32> to vector<1x16x8xf32>
    %34 = vector.broadcast %32 : vector<1x1x8xf32> to vector<1x16x8xf32>
    %35 = arith.mulf %33, %34 : vector<1x16x8xf32>
    %c0_9 = arith.constant 0 : index
    %c0_10 = arith.constant 0 : index
    %c0_11 = arith.constant 0 : index
    %36 = vector.load %arg3[%c0_9, %c0_10, %c0_11] : memref<1x16x8xf32, #tpu.memory_space<vmem>>, vector<1x16x8xf32>
    tpu.vector_store %arg3[%c0_9, %c0_10, %c0_11], %35 {strides = array<i32>} : memref<1x16x8xf32, #tpu.memory_space<vmem>>, vector<1x16x8xf32>,
    return
  }
  func.func @transform_0(%arg0: i32) -> (i32, i32, i32) {
    %c0_i32 = arith.constant 0 : i32
    %c0_i32_0 = arith.constant 0 : i32
    %c0_i32_1 = arith.constant 0 : i32
    return %arg0, %c0_i32, %c0_i32_0 : i32, i32, i32
  }
  func.func @transform_1(%arg0: i32) -> (i32, i32) {
    %c0_i32 = arith.constant 0 : i32
    %c0_i32_0 = arith.constant 0 : i32
    %c0_i32_1 = arith.constant 0 : i32
    return %c0_i32, %c0_i32_0 : i32, i32
  }
  func.func @transform_2(%arg0: i32) -> (i32, i32, i32) {
    %c0_i32 = arith.constant 0 : i32
    %c0_i32_0 = arith.constant 0 : i32
    %c0_i32_1 = arith.constant 0 : i32
    return %arg0, %c0_i32, %c0_i32_0 : i32, i32, i32
  }
}

</mosaic_0001>

<llo_original>
// kernel: tpu_custom_call.1
$region0: #{tpu_custom_call.1}
  #allocation0 [shape = 'u32[]', space=smem, size = 0x4, offset = 0x4, fixed_abs, tag = 'smem constant byte address 0x4 - core index']
  #allocation1 [shape = 'u32[72,128]{1,0:T(1,128)}', space=vmem, size = 0x9000, scoped, tag = 'internal scratch']
  %s0 = inlined_call_operand.vmem [shape: f32[2,8,384], index: 0, kind: input, shape index: {}]
  %s1 = inlined_call_operand.vmem [shape: bf16[384,48], index: 1, kind: input, shape index: {}]
  %s2 = inlined_call_operand.vmem [shape: f32[2,16,8], index: 2, kind: output, shape index: {}]
  %s3 = sld [smem:[#allocation0]]
  $region41: #{tpu_custom_call.1} parent=0
    _
  %s5 = ssub.s32 1, %s3
  %s6 = scalar_select 0, %s5, %s3
  loop: start=0, step=1, limit=4
  $region2: #{tpu_custom_call.1} parent=0 // loop_pre_header
    _
  $region3: #{tpu_custom_call.1} parent=0 // loop_header
    %s8 = sphi 0, %s12
    %p9 = scmp.ge.s32.totalorder %s8, 4
    %s18 = sphi 0, %s20
    %s21 = sphi 0, %s18
    %s22 = sphi 0, %s21
    %s38 = sphi 0, %s22
    %s42 = sphi 0, %s42
    %s44 = sphi 0, %s42
    %s45 = sphi 0, %s44
    %s59 = sphi 0, %s45
    %s65 = sphi 0, %s67
    %s68 = sphi 0, %s65
    %s69 = sphi 0, %s68
    %s85 = sphi 0, %s69
  $region4: #{tpu_custom_call.1} parent=0 // loop_header_branch
    %11 = sbr.rel (%p9) target = $region8
  $region5: #{tpu_custom_call.1} parent=0 // loop_body
    %s13 = ssub.s32 %s8, 1
    %s14 = ssub.s32 %s8, 2
    %s15 = sadd.s32 %s8, 1
    %s16 = ssub.s32 %s8, %s15
    %p17 = scmp.eq.s32.totalorder %s16, 0
    %s19 = sadd.s32 %s18, 1
    %s20 = scalar_select %p17, %s18, %s19
    %p23 = pneg %p17
    %p24 = scmp.eq.s32.totalorder %s8, 1
    %p25 = por %p23, %p24
    %p26 = scmp.ne.s32.totalorder %s18, %s21
    %p27 = scmp.eq.s32.totalorder %s8, 0
    %p28 = por %p26, %p27
    %p29 = scmp.ne.s32.totalorder %s18, %s21
    %p30 = scmp.eq.s32.totalorder %s13, 1
    %p31 = por %p29, %p30
    %p32 = scmp.ne.s32.totalorder %s21, %s22
    %p33 = scmp.eq.s32.totalorder %s13, 0
    %p34 = por %p32, %p33
    %p35 = scmp.ne.s32.totalorder %s21, %s22
    %p36 = scmp.eq.s32.totalorder %s14, 1
    %p37 = por %p35, %p36
    %p39 = scmp.ne.s32.totalorder %s22, %s38
    %p40 = scmp.eq.s32.totalorder %s14, 0
    %p41 = por %p39, %p40
    %s43 = sadd.s32 %s42, 1
    %p46 = scmp.eq.s32.totalorder %s8, 1
    %p47 = scmp.ne.s32.totalorder %s42, %s44
    %p48 = scmp.eq.s32.totalorder %s8, 0
    %p49 = por %p47, %p48
    %p50 = scmp.ne.s32.totalorder %s42, %s44
    %p51 = scmp.eq.s32.totalorder %s13, 1
    %p52 = por %p50, %p51
    %p53 = scmp.ne.s32.totalorder %s44, %s45
    %p54 = scmp.eq.s32.totalorder %s13, 0
    %p55 = por %p53, %p54
    %p56 = scmp.ne.s32.totalorder %s44, %s45
    %p57 = scmp.eq.s32.totalorder %s14, 1
    %p58 = por %p56, %p57
    %p60 = scmp.ne.s32.totalorder %s45, %s59
    %p61 = scmp.eq.s32.totalorder %s14, 0
    %p62 = por %p60, %p61
    %s63 = ssub.s32 %s8, %s15
    %p64 = scmp.eq.s32.totalorder %s63, 0
    %s66 = sadd.s32 %s65, 1
    %s67 = scalar_select %p64, %s65, %s66
    %p70 = pneg %p64
    %p71 = scmp.eq.s32.totalorder %s8, 1
    %p72 = por %p70, %p71
    %p73 = scmp.ne.s32.totalorder %s65, %s68
    %p74 = scmp.eq.s32.totalorder %s8, 0
    %p75 = por %p73, %p74
    %p76 = scmp.ne.s32.totalorder %s65, %s68
    %p77 = scmp.eq.s32.totalorder %s13, 1
    %p78 = por %p76, %p77
    %p79 = scmp.ne.s32.totalorder %s68, %s69
    %p80 = scmp.eq.s32.totalorder %s13, 0
    %p81 = por %p79, %p80
    %p82 = scmp.ne.s32.totalorder %s68, %s69
    %p83 = scmp.eq.s32.totalorder %s14, 1
    %p84 = por %p82, %p83
    %p86 = scmp.ne.s32.totalorder %s69, %s85
    %p87 = scmp.eq.s32.totalorder %s14, 0
    %p88 = por %p86, %p87
    %p89 = scmp.le.s32.totalorder 1, %s8
    %p90 = scmp.lt.s32.totalorder %s8, 3
    %p91 = pnand %p89, %p90
    %p92 = pneg %p91
    // Predicated region
    $region9: #{tpu_custom_call.1} parent=5 // pred_check
      _
    $region10: #{tpu_custom_call.1} parent=5 // pred_check_branch
      %94 = sbr.rel (%p91) target = $region12
    $region11: #{tpu_custom_call.1} parent=5 // pred_region
      %s95 = ssub.s32 %s8, 1
      // Predicated region
      $region13: #{tpu_custom_call.1} parent=11 // pred_check
        %p96 = pneg %p55
      $region14: #{tpu_custom_call.1} parent=11 // pred_check_branch
        %98 = sbr.rel (%p96) target = $region16
      $region15: #{tpu_custom_call.1} parent=11 // pred_region
        _
      $region16: #{tpu_custom_call.1} parent=11 // pred_fallthru
        _
    $region12: #{tpu_custom_call.1} parent=5 // pred_fallthru
      _
    %p99 = scmp.lt.s32.totalorder %s8, 2
    // Predicated region
    $region17: #{tpu_custom_call.1} parent=5 // pred_check
      %p100 = pneg %p99
    $region18: #{tpu_custom_call.1} parent=5 // pred_check_branch
      %102 = sbr.rel (%p100) target = $region20
    $region19: #{tpu_custom_call.1} parent=5 // pred_region
      // Predicated region
      $region21: #{tpu_custom_call.1} parent=19 // pred_check
        %p103 = pneg %p28
      $region22: #{tpu_custom_call.1} parent=19 // pred_check_branch
        %105 = sbr.rel (%p103) target = $region24
      $region23: #{tpu_custom_call.1} parent=19 // pred_region
        %p106 = scmp.lt.s32.totalorder %s8, 1
        %s107 = scalar_select %p106, %s8, 1
        %s108 = smul.addr %s107, 3
        %s109 = smul.addr %s108, 8
        %s110 = scalar_lea.vmem %s0, %s109
      $region24: #{tpu_custom_call.1} parent=19 // pred_fallthru
        _
    $region20: #{tpu_custom_call.1} parent=5 // pred_fallthru
      _
    %p111 = scmp.le.s32.totalorder 1, %s8
    %p112 = scmp.lt.s32.totalorder %s8, 3
    %p113 = pnand %p111, %p112
    %p114 = pneg %p113
    // Predicated region
    $region25: #{tpu_custom_call.1} parent=5 // pred_check
      _
    $region26: #{tpu_custom_call.1} parent=5 // pred_check_branch
      %116 = sbr.rel (%p113) target = $region28
    $region27: #{tpu_custom_call.1} parent=5 // pred_region
      %s117 = ssub.s32 %s8, 1
      %p118 = scmp.lt.s32.totalorder %s13, 1
      %s119 = scalar_select %p118, %s13, 1
      %s120 = smul.addr %s119, 3
      %s121 = smul.addr %s120, 8
      %s122 = scalar_lea.vmem %s0, %s121
      %p123 = pneg %p34
      %p124 = pneg %p31
      %p125 = pneg %p55
      %p126 = pneg %p52
      %p127 = pneg %p81
      %p128 = pneg %p78
      %p129 = scmp.lt.s32.totalorder %s13, 1
      %s130 = scalar_select %p129, %s13, 1
      %s131 = smul.addr %s130, 2
      %s132 = smul.addr %s131, 8
      %s133 = scalar_lea.vmem %s2, %s132
      %p134 = scmp.lt.s32.totalorder %s13, 1
      %s135 = scalar_select %p134, %s13, 1
      %s136 = smul.addr %s135, 3
      %s137 = smul.addr %s136, 8
      %s138 = scalar_lea.vmem %s0, %s137
      %p139 = scmp.lt.s32.totalorder %s13, 1
      %s140 = scalar_select %p139, %s13, 1
      %s141 = smul.addr %s140, 2
      %s142 = smul.addr %s141, 8
      %s143 = scalar_lea.vmem %s2, %s142
      %v146 = vld [vmem:[%s138] sm:$0xff]
      %v147 = vld [vmem:[%s138 + $0x8] sm:$0xff]
      %v148 = vld [vmem:[%s138 + $0x10] sm:$0xff]
      %v149 = vpack.c.bf16 %v147, %v146
      %v150 = vpack.c.bf16 %v148, %v148
      %v151 = vld [vmem:[%s1] sm:$0xf]
      %v152 = vld [vmem:[%s1 + $0x4] sm:$0xf]
      %v153 = vld [vmem:[%s1 + $0x8] sm:$0xf]
      %v154 = vld [vmem:[%s1 + $0xc] sm:$0xf]
      %v155 = vld [vmem:[%s1 + $0x10] sm:$0xf]
      %v156 = vld [vmem:[%s1 + $0x14] sm:$0xf]
      %v157 = vld [vmem:[%s1 + $0x18] sm:$0xf]
      %v158 = vld [vmem:[%s1 + $0x1c] sm:$0xf]
      %v159 = vld [vmem:[%s1 + $0x20] sm:$0xf]
      %v160 = vld [vmem:[%s1 + $0x24] sm:$0xf]
      %v161 = vld [vmem:[%s1 + $0x28] sm:$0xf]
      %v162 = vld [vmem:[%s1 + $0x2c] sm:$0xf]
      %v163 = vld [vmem:[%s1 + $0x30] sm:$0xf]
      %v164 = vld [vmem:[%s1 + $0x34] sm:$0xf]
      %v165 = vld [vmem:[%s1 + $0x38] sm:$0xf]
      %v166 = vld [vmem:[%s1 + $0x3c] sm:$0xf]
      %v167 = vld [vmem:[%s1 + $0x40] sm:$0xf]
      %v168 = vld [vmem:[%s1 + $0x44] sm:$0xf]
      %v169 = vld [vmem:[%s1 + $0x48] sm:$0xf]
      %v170 = vld [vmem:[%s1 + $0x4c] sm:$0xf]
      %v171 = vld [vmem:[%s1 + $0x50] sm:$0xf]
      %v172 = vld [vmem:[%s1 + $0x54] sm:$0xf]
      %v173 = vld [vmem:[%s1 + $0x58] sm:$0xf]
      %v174 = vld [vmem:[%s1 + $0x5c] sm:$0xf]
      %v175 = vld [vmem:[%s1 + $0x60] sm:$0xf]
      %v176 = vld [vmem:[%s1 + $0x64] sm:$0xf]
      %v177 = vld [vmem:[%s1 + $0x68] sm:$0xf]
      %v178 = vld [vmem:[%s1 + $0x6c] sm:$0xf]
      %v179 = vld [vmem:[%s1 + $0x70] sm:$0xf]
      %v180 = vld [vmem:[%s1 + $0x74] sm:$0xf]
      %v181 = vld [vmem:[%s1 + $0x78] sm:$0xf]
      %v182 = vld [vmem:[%s1 + $0x7c] sm:$0xf]
      %v183 = vld [vmem:[%s1 + $0x80] sm:$0xf]
      %v184 = vld [vmem:[%s1 + $0x84] sm:$0xf]
      %v185 = vld [vmem:[%s1 + $0x88] sm:$0xf]
      %v186 = vld [vmem:[%s1 + $0x8c] sm:$0xf]
      %v187 = vld [vmem:[%s1 + $0x90] sm:$0xf]
      %v188 = vld [vmem:[%s1 + $0x94] sm:$0xf]
      %v189 = vld [vmem:[%s1 + $0x98] sm:$0xf]
      %v190 = vld [vmem:[%s1 + $0x9c] sm:$0xf]
      %v191 = vld [vmem:[%s1 + $0xa0] sm:$0xf]
      %v192 = vld [vmem:[%s1 + $0xa4] sm:$0xf]
      %v193 = vld [vmem:[%s1 + $0xa8] sm:$0xf]
      %v194 = vld [vmem:[%s1 + $0xac] sm:$0xf]
      %v195 = vld [vmem:[%s1 + $0xb0] sm:$0xf]
      %v196 = vld [vmem:[%s1 + $0xb4] sm:$0xf]
      %v197 = vld [vmem:[%s1 + $0xb8] sm:$0xf]
      %v198 = vld [vmem:[%s1 + $0xbc] sm:$0xf]
      %v201 = vunpack.c.l.b16 %v149
      %v202 = vunpack.c.h.b16 %v149
      %v203 = vunpack.c.l.b16 %v150
      %v204 = vpack.c.b16 %v201, %v201
      %v205 = vpack.c.b16 %v202, %v202
      %v206 = vpack.c.b16 %v203, %v203
      %v258 = vunpack.c.l.b16 %v151
      %v259 = vunpack.c.l.b16 %v152
      %v260 = vunpack.c.l.b16 %v153
      %v261 = vunpack.c.l.b16 %v154
      %v262 = vunpack.c.l.b16 %v155
      %v263 = vunpack.c.l.b16 %v156
      %v264 = vunpack.c.l.b16 %v157
      %v265 = vunpack.c.l.b16 %v158
      %v266 = vunpack.c.l.b16 %v159
      %v267 = vunpack.c.l.b16 %v160
      %v268 = vunpack.c.l.b16 %v161
      %v269 = vunpack.c.l.b16 %v162
      %v270 = vunpack.c.l.b16 %v163
      %v271 = vunpack.c.l.b16 %v164
      %v272 = vunpack.c.l.b16 %v165
      %v273 = vunpack.c.l.b16 %v166
      %v274 = vunpack.c.l.b16 %v167
      %v275 = vunpack.c.l.b16 %v168
      %v276 = vunpack.c.l.b16 %v169
      %v277 = vunpack.c.l.b16 %v170
      %v278 = vunpack.c.l.b16 %v171
      %v279 = vunpack.c.l.b16 %v172
      %v280 = vunpack.c.l.b16 %v173
      %v281 = vunpack.c.l.b16 %v174
      %v282 = vunpack.c.l.b16 %v175
      %v283 = vunpack.c.l.b16 %v176
      %v284 = vunpack.c.l.b16 %v177
      %v285 = vunpack.c.l.b16 %v178
      %v286 = vunpack.c.l.b16 %v179
      %v287 = vunpack.c.l.b16 %v180
      %v288 = vunpack.c.l.b16 %v181
      %v289 = vunpack.c.l.b16 %v182
      %v290 = vunpack.c.l.b16 %v183
      %v291 = vunpack.c.l.b16 %v184
      %v292 = vunpack.c.l.b16 %v185
      %v293 = vunpack.c.l.b16 %v186
      %v294 = vunpack.c.l.b16 %v187
      %v295 = vunpack.c.l.b16 %v188
      %v296 = vunpack.c.l.b16 %v189
      %v297 = vunpack.c.l.b16 %v190
      %v298 = vunpack.c.l.b16 %v191
      %v299 = vunpack.c.l.b16 %v192
      %v300 = vunpack.c.l.b16 %v193
      %v301 = vunpack.c.l.b16 %v194
      %v302 = vunpack.c.l.b16 %v195
      %v303 = vunpack.c.l.b16 %v196
      %v304 = vunpack.c.l.b16 %v197
      %v305 = vunpack.c.l.b16 %v198
      %v306 = vpack.c.b16 %v259, %v258
      %v307 = vpack.c.b16 %v261, %v260
      %v308 = vpack.c.b16 %v263, %v262
      %v309 = vpack.c.b16 %v265, %v264
      %v310 = vpack.c.b16 %v267, %v266
      %v311 = vpack.c.b16 %v269, %v268
      %v312 = vpack.c.b16 %v271, %v270
      %v313 = vpack.c.b16 %v273, %v272
      %v314 = vpack.c.b16 %v275, %v274
      %v315 = vpack.c.b16 %v277, %v276
      %v316 = vpack.c.b16 %v279, %v278
      %v317 = vpack.c.b16 %v281, %v280
      %v318 = vpack.c.b16 %v283, %v282
      %v319 = vpack.c.b16 %v285, %v284
      %v320 = vpack.c.b16 %v287, %v286
      %v321 = vpack.c.b16 %v289, %v288
      %v322 = vpack.c.b16 %v291, %v290
      %v323 = vpack.c.b16 %v293, %v292
      %v324 = vpack.c.b16 %v295, %v294
      %v325 = vpack.c.b16 %v297, %v296
      %v326 = vpack.c.b16 %v299, %v298
      %v327 = vpack.c.b16 %v301, %v300
      %v328 = vpack.c.b16 %v303, %v302
      %v329 = vpack.c.b16 %v305, %v304
      %354 = vmatpush.bf16.msra.mxu0 %v313
      %355 = vmatpush.bf16.msra.mxu0 %v312
      %356 = vmatpush.bf16.msra.mxu0 %v311
      %357 = vmatpush.bf16.msra.mxu0 %v310
      %358 = vmatpush.bf16.msra.mxu0 %v309
      %359 = vmatpush.bf16.msra.mxu0 %v308
      %360 = vmatpush.bf16.msra.mxu0 %v307
      %361 = vmatpush.bf16.msra.mxu0 %v306
      %362 = vmatmul.bf16.gmra.mxu0 %v204
      %v363 = vpop.f32.mrf.mxu0
      %v364 = vadd.f32 0.0, %v363
      %v365 = vpop.f32.mrf.mxu0
      %366 = vdwg.mxu0
      %367 = vmatpush.bf16.msra.mxu0 %v321
      %368 = vmatpush.bf16.msra.mxu0 %v320
      %369 = vmatpush.bf16.msra.mxu0 %v319
      %370 = vmatpush.bf16.msra.mxu0 %v318
      %371 = vmatpush.bf16.msra.mxu0 %v317
      %372 = vmatpush.bf16.msra.mxu0 %v316
      %373 = vmatpush.bf16.msra.mxu0 %v315
      %374 = vmatpush.bf16.msra.mxu0 %v314
      %375 = vmatmul.bf16.gmra.mxu0 %v205
      %v376 = vpop.f32.mrf.mxu0
      %v377 = vadd.f32 %v364, %v376
      %v378 = vpop.f32.mrf.mxu0
      %379 = vdwg.mxu0
      %380 = vmatpush.bf16.msra.mxu0 %v329
      %381 = vmatpush.bf16.msra.mxu0 %v328
      %382 = vmatpush.bf16.msra.mxu0 %v327
      %383 = vmatpush.bf16.msra.mxu0 %v326
      %384 = vmatpush.bf16.msra.mxu0 %v325
      %385 = vmatpush.bf16.msra.mxu0 %v324
      %386 = vmatpush.bf16.msra.mxu0 %v323
      %387 = vmatpush.bf16.msra.mxu0 %v322
      %388 = vmatmul.bf16.gmra.mxu0 %v206
      %v389 = vpop.f32.mrf.mxu0
      %v390 = vadd.f32 %v377, %v389
      %v391 = vpop.f32.mrf.mxu0
      %392 = vdwg.mxu0
      %v393 = vpack.c.bf16 %v390, %v390
      %395 = vrot.lane.b32.xlu0 %v393, 96
      %v396 = vpop.permute.xlu0 %395
      %398 = vxpose.xlu0.c.b16.start [1/8] %v396, 128
      %399 = vxpose.xlu0.c.b16.cont [2/8] 0, 128
      %400 = vxpose.xlu0.c.b16.cont [3/8] 0, 128
      %401 = vxpose.xlu0.c.b16.cont [4/8] 0, 128
      %402 = vxpose.xlu0.c.b16.cont [5/8] 0, 128
      %403 = vxpose.xlu0.c.b16.cont [6/8] 0, 128
      %404 = vxpose.xlu0.c.b16.cont [7/8] 0, 128
      %405 = vxpose.xlu0.c.b16.end [8/8] 0, 128
      %v406 = vpop.trf.xlu0
      %v407 = vpop.trf.xlu0
      %v408 = vpop.trf.xlu0
      %v409 = vpop.trf.xlu0
      %v410 = vpop.trf.xlu0
      %v411 = vpop.trf.xlu0
      %v412 = vpop.trf.xlu0
      %v413 = vpop.trf.xlu0
      %v414 = vlaneseq
      %v415 = vand.u32 %v414, 127
      %v416 = vlaneseq
      %v417 = vshrl.u32 %v416, 7
      %v418 = vsub.s32 %v415, %v417
      %v419 = vunpack.c.l.b16 %v393
      %v420 = vpack.c.b16 %v419, %v419
      %421 = vrot.lane.b32.xlu0 %v420, 112
      %v422 = vpop.permute.xlu0 %421
      %vm423 = vcmask 130048
      %v425 = vsel %vm423, %v393, 0
      %v428 = vsel %vm423, %v422, 0
      %430 = vmatpush.bf16.xpose.msra.mxu0 0
      %431 = vmatpush.bf16.xpose.msra.mxu0 0
      %432 = vmatpush.bf16.xpose.msra.mxu0 0
      %433 = vmatpush.bf16.xpose.msra.mxu0 0
      %434 = vmatpush.bf16.xpose.msra.mxu0 0
      %435 = vmatpush.bf16.xpose.msra.mxu0 0
      %436 = vmatpush.bf16.xpose.msra.mxu0 0
      %437 = vmatpush.bf16.xpose.msra.mxu0 %v428
      %438 = vmatmul.bf16.gmra.mxu0 %v425
      %v439 = vpop.f32.mrf.mxu0
      %v440 = vadd.f32 0.0, %v439
      %v441 = vpop.f32.mrf.mxu0
      %442 = vdwg.mxu0
      %vm443 = vcmp.le.s32.totalorder %v418, 0
      %v444 = vsel %vm443, %v440, -1e+30
      %vm445 = vcmask 64512
      %v446 = vsel %vm445, %v444, -inf
      %447 = vmax.xlane.f32.xlu0 %v446
      %v448 = vpop.xlane.xlu0 %447
      %v449 = vsub.f32 %v444, %v448
      %v450 = vmul.f32 %v449, 1.442695
      %v451 = vpow.pop %v450
      %v452 = vpack.c.bf16 %v451, %v451
      %v454 = vsel %vm445, %v406, 0
      %v457 = vsel %vm445, 1065369472, 0
      %v460 = vsel %vm445, %v452, 0
      %462 = vmatpush.bf16.xpose.msra.mxu0 0
      %463 = vmatpush.bf16.xpose.msra.mxu0 0
      %464 = vmatpush.bf16.xpose.msra.mxu0 0
      %465 = vmatpush.bf16.xpose.msra.mxu0 0
      %466 = vmatpush.bf16.xpose.msra.mxu0 0
      %467 = vmatpush.bf16.xpose.msra.mxu0 0
      %468 = vmatpush.bf16.xpose.msra.mxu0 0
      %469 = vmatpush.bf16.xpose.msra.mxu0 %v460
      %470 = vmatmul.bf16.gmra.mxu0 %v454
      %v471 = vpop.f32.mrf.mxu0
      %v472 = vadd.f32 0.0, %v471
      %v473 = vpop.f32.mrf.mxu0
      %v474 = vadd.f32 0.0, %v473
      %475 = vmatmul.bf16.gmra.mxu0 %v457
      %v476 = vpop.f32.mrf.mxu0
      %v477 = vadd.f32 0.0, %v476
      %v478 = vpop.f32.mrf.mxu0
      %479 = vdwg.mxu0
      %v480 = vrcp.pop %v477
      %v481 = vperm.slane %v480, 0
      %v482 = vmul.f32 %v472, %v481
      %v483 = vmul.f32 %v474, %v481
      %484 = vst.msk [vmem:[%s143] sm:$0xff] %vm445, %v482
      %485 = vst.msk [vmem:[%s143 + $0x8] sm:$0xff] %vm445, %v483
      %p486 = scmp.lt.s32.totalorder %s13, 1
      %s487 = scalar_select %p486, %s13, 1
      %s488 = smul.addr %s487, 2
      %s489 = smul.addr %s488, 8
      %s490 = scalar_lea.vmem %s2, %s489
      // Predicated region
      $region29: #{tpu_custom_call.1} parent=27 // pred_check
        %p491 = pneg %p78
      $region30: #{tpu_custom_call.1} parent=27 // pred_check_branch
        %493 = sbr.rel (%p491) target = $region32
      $region31: #{tpu_custom_call.1} parent=27 // pred_region
        _
      $region32: #{tpu_custom_call.1} parent=27 // pred_fallthru
        _
    $region28: #{tpu_custom_call.1} parent=5 // pred_fallthru
      _
    %p494 = scmp.le.s32.totalorder 2, %s8
    // Predicated region
    $region33: #{tpu_custom_call.1} parent=5 // pred_check
      %p495 = pneg %p494
    $region34: #{tpu_custom_call.1} parent=5 // pred_check_branch
      %497 = sbr.rel (%p495) target = $region36
    $region35: #{tpu_custom_call.1} parent=5 // pred_region
      %s498 = ssub.s32 %s8, 2
      // Predicated region
      $region37: #{tpu_custom_call.1} parent=35 // pred_check
        %p499 = pneg %p84
      $region38: #{tpu_custom_call.1} parent=35 // pred_check_branch
        %501 = sbr.rel (%p499) target = $region40
      $region39: #{tpu_custom_call.1} parent=35 // pred_region
        %p502 = scmp.lt.s32.totalorder %s14, 1
        %s503 = scalar_select %p502, %s14, 1
        %s504 = smul.addr %s503, 2
        %s505 = smul.addr %s504, 8
        %s506 = scalar_lea.vmem %s2, %s505
      $region40: #{tpu_custom_call.1} parent=35 // pred_fallthru
        _
    $region36: #{tpu_custom_call.1} parent=5 // pred_fallthru
      _
  $region6: #{tpu_custom_call.1} parent=0 // loop_footer
    %s12 = sadd.s32 1, %s8
  $region7: #{tpu_custom_call.1} parent=0 // loop_footer_branch
    %7 = sbr.rel target = $region3
  $region8: #{tpu_custom_call.1} parent=0 // loop_exit
    _

</llo_original>
